<compile_context>
chip_gen: v7x
topology: tpu7x:2x2x1
jax: 0.10.0
libtpu: 0.0.40
codegen_flags: <defaults>
</compile_context>

<pallas_src>
import jax
import jax.numpy as jnp
from jax.experimental import pallas as pl
from jax.experimental.pallas import tpu as pltpu


# ----------------------------------------------------------------------------
# Pallas kernel: fused (im2col-GEMM + folded BatchNorm/bias) for one tile
# ----------------------------------------------------------------------------
def _patch_embed_gemm_kernel(p_ref, w_ref, b_ref, o_ref):
    # p_ref: (tm, K)   patch rows                 (VMEM, input dtype)
    # w_ref: (K,  tn)  BN-folded conv weight      (VMEM, input dtype)
    # b_ref: (1,  tn)  BN-folded conv/BN bias     (VMEM, f32)
    # o_ref: (tm, tn)  token tile, E on lanes
    acc = jnp.dot(p_ref[...], w_ref[...], preferred_element_type=jnp.float32)
    o_ref[...] = (acc + b_ref[...]).astype(o_ref.dtype)


def _round_up(x, m):
    return (x + m - 1) // m * m


# ----------------------------------------------------------------------------
# Wrapper: BN folding + transpose-free im2col + tiled pallas_call
# ----------------------------------------------------------------------------
def overlap_patch_embed(x, w, b, bn_gamma, bn_beta, bn_mean, bn_var,
                        *, stride=4, bn_eps=1e-5):
    """OverlapPatchEmbed forward.  x: (B, C, H, W) NCHW, w: (E, C, P, P).
    Returns (tokens (B, H_out*W_out, E), H_out, W_out)."""
    B, C, H, W = x.shape
    E, Cw, KH, KW = w.shape
    assert Cw == C
    pad_h, pad_w = KH // 2, KW // 2
    H_out = (H + 2 * pad_h - KH) // stride + 1
    W_out = (W + 2 * pad_w - KW) // stride + 1
    N = H_out * W_out
    K = C * KH * KW
    M = B * N
    dtype = x.dtype
    itemsize = jnp.dtype(dtype).itemsize

    # ---- fold BatchNorm (eval, running stats) + conv bias into (W_eff, b_eff)
    scale = bn_gamma.astype(jnp.float32) * jax.lax.rsqrt(
        bn_var.astype(jnp.float32) + bn_eps)                        # (E,)
    w_eff = w.astype(jnp.float32) * scale[:, None, None, None]      # (E,C,KH,KW)
    b_eff = bn_beta.astype(jnp.float32) + scale * (
        b.astype(jnp.float32) - bn_mean.astype(jnp.float32))        # (E,)
    # K ordering is (kh, kw, c) to match the NHWC tap concatenation below:
    # reorder the SMALL weight instead of transposing the big patches tensor.
    w2 = jnp.transpose(w_eff, (2, 3, 1, 0)).reshape(K, E).astype(dtype)  # (K,E)
    b2 = b_eff.reshape(1, E)                                             # (1,E) f32

    # ---- im2col without any transpose of the (M, K) patches tensor.
    # Overlapping strided patch extraction is pure data layout (zero FLOPs):
    # slice strided taps from an NHWC copy of x and concatenate on the last
    # axis, so `patches` is produced with a single HBM write.
    x_nhwc = jnp.transpose(x, (0, 2, 3, 1))                              # (B,H,W,C)
    x_p = jnp.pad(x_nhwc, ((0, 0), (pad_h, pad_h), (pad_w, pad_w), (0, 0)))
    taps = []
    for kh in range(KH):
        for kw in range(KW):
            taps.append(jax.lax.slice(
                x_p,
                (0, kh, kw, 0),
                (B, kh + stride * (H_out - 1) + 1,
                 kw + stride * (W_out - 1) + 1, C),
                (1, stride, stride, 1)))           # (B, Ho, Wo, C)
    patches = jnp.concatenate(taps, axis=-1).reshape(M, K)   # rows (b,oh,ow)
    # TODO(synk): fuse the patch gather into the kernel (memory_space=pl.ANY +
    # pltpu.make_async_copy row-slab DMAs) to drop this im2col HBM pass.

    # ---- tn: keep the whole embed_dim resident when the (K, E) weight tile
    # fits a modest VMEM budget (then its block index is constant and it is
    # DMA'd exactly once); otherwise fall back to 512-lane tiles.
    if K * E * itemsize <= 16 * 1024 * 1024:
        tn = E
    else:
        tn = 512

    def _footprint(tm_, tn_):
        # double-buffered patch / weight / bias / output tiles
        return (2 * tm_ * K * itemsize + 2 * K * tn_ * itemsize
                + 2 * tn_ * 4 + 2 * tm_ * tn_ * itemsize)

    VMEM_BUDGET = 40 * 1024 * 1024       # fits v7x (64 MiB) as well as v5e/v6e
    tm = _round_up(min(M, 1024), 8)      # big M tiles: fewer grid steps, fat DMAs
    while tm > 8 and _footprint(tm, tn) > VMEM_BUDGET:
        tm = _round_up(tm // 2, 8)

    grid = (pl.cdiv(M, tm), pl.cdiv(E, tn))   # ragged last blocks masked by Pallas
    vmem_limit = int(min(48 * 1024 * 1024,
                         max(32 * 1024 * 1024,
                             _footprint(tm, tn) + (4 << 20))))

    cost = pl.CostEstimate(
        flops=2 * M * K * E,
        bytes_accessed=(M * K * itemsize + K * E * itemsize
                        + E * 4 + M * E * itemsize),
        transcendentals=0)

    out = pl.pallas_call(
        _patch_embed_gemm_kernel,
        out_shape=jax.ShapeDtypeStruct((M, E), dtype),
        grid_spec=pltpu.PrefetchScalarGridSpec(
            num_scalar_prefetch=0,
            grid=grid,
            in_specs=[
                pl.BlockSpec((tm, K), lambda i, j: (i, 0)),
                pl.BlockSpec((K, tn), lambda i, j: (0, j)),
                pl.BlockSpec((1, tn), lambda i, j: (0, j)),
            ],
            out_specs=pl.BlockSpec((tm, tn), lambda i, j: (i, j)),
        ),
        compiler_params=pltpu.CompilerParams(
            dimension_semantics=("parallel", "parallel"),
            vmem_limit_bytes=vmem_limit,
        ),
        cost_estimate=cost,
    )(patches, w2, b2)

    tokens = out.reshape(B, N, E)
    # TODO(synk): for store-bound tiny embed dims (E<128), fold 128//E token
    # rows into the lane axis of the output block for unmasked 128-wide vst.
    return tokens, H_out, W_out


# ----------------------------------------------------------------------------
if __name__ == "__main__":
    key = jax.random.PRNGKey(0)
    k_x, k_w, k_b, k_g, k_be, k_m, k_v = jax.random.split(key, 7)

    # Small shapes consistent with the module: patch_size=7, stride=4,
    # in_chans=3, embed_dim=32, input 2x3x16x16 -> tokens 2x16x32.
    B, C, H, W = 2, 3, 16, 16
    E, P, S = 32, 7, 4
    BN_EPS = 1e-5

    x = jax.random.normal(k_x, (B, C, H, W), dtype=jnp.float32)
    w = jax.random.normal(k_w, (E, C, P, P), dtype=jnp.float32) * 0.1
    b = jax.random.normal(k_b, (E,), dtype=jnp.float32) * 0.1
    gamma = 1.0 + 0.1 * jax.random.normal(k_g, (E,), dtype=jnp.float32)
    beta = 0.1 * jax.random.normal(k_be, (E,), dtype=jnp.float32)
    mean = 0.1 * jax.random.normal(k_m, (E,), dtype=jnp.float32)
    var = jax.random.uniform(k_v, (E,), dtype=jnp.float32, minval=0.5, maxval=1.5)

    tokens, H_out, W_out = overlap_patch_embed(
        x, w, b, gamma, beta, mean, var, stride=S, bn_eps=BN_EPS)
    jax.block_until_ready(tokens)

    # Reference: XLA conv + eval-mode BN + flatten/transpose (sanity check).
    y_ref = jax.lax.conv_general_dilated(
        x, w, window_strides=(S, S),
        padding=((P // 2, P // 2), (P // 2, P // 2)),
        dimension_numbers=("NCHW", "OIHW", "NCHW"),
        precision=jax.lax.Precision.HIGHEST)
    y_ref = y_ref + b[None, :, None, None]
    y_ref = (y_ref - mean[None, :, None, None]) * (
        gamma[None, :, None, None]
        / jnp.sqrt(var[None, :, None, None] + BN_EPS)) + beta[None, :, None, None]
    ref_tokens = y_ref.reshape(B, E, H_out * W_out).transpose(0, 2, 1)

    assert tokens.shape == (B, H_out * W_out, E)
    assert (H_out, W_out) == (4, 4)
    assert bool(jnp.all(jnp.isfinite(tokens)))
    err = float(jnp.max(jnp.abs(tokens - ref_tokens)))
    tol = 5e-2 * (float(jnp.max(jnp.abs(ref_tokens))) + 1.0)
    assert err <= tol, f"max abs err {err} > tol {tol}"
    print("KERNEL_OK")
</pallas_src>

<mosaic_0001>
module attributes {stable_mosaic.version = 11 : i64} {
  func.func @_patch_embed_gemm_kernel(%arg0: i32, %arg1: i32, %arg2: memref<32x147xf32, #tpu.memory_space<vmem>>, %arg3: memref<147x32xf32, #tpu.memory_space<vmem>>, %arg4: memref<1x32xf32, #tpu.memory_space<vmem>>, %arg5: memref<32x32xf32, #tpu.memory_space<vmem>>) attributes {dimension_semantics = [#tpu.dimension_semantics<parallel>, #tpu.dimension_semantics<parallel>], iteration_bounds = array<i64: 1, 1>, scalar_prefetch = 0 : i64, scratch_operands = 0 : i64, tpu.core_type = #tpu.core_type<tc>, window_params = [{transform_indices = @transform_0, window_bounds = array<i64: 32, 147>}, {transform_indices = @transform_1, window_bounds = array<i64: 147, 32>}, {transform_indices = @transform_2, window_bounds = array<i64: 1, 32>}, {transform_indices = @transform_3, window_bounds = array<i64: 32, 32>}]} {
    %c0 = arith.constant 0 : index
    %c0_0 = arith.constant 0 : index
    %0 = vector.load %arg2[%c0, %c0_0] : memref<32x147xf32, #tpu.memory_space<vmem>>, vector<32x147xf32>
    %c0_1 = arith.constant 0 : index
    %c0_2 = arith.constant 0 : index
    %1 = vector.load %arg3[%c0_1, %c0_2] : memref<147x32xf32, #tpu.memory_space<vmem>>, vector<147x32xf32>
    %cst = arith.constant dense<0.000000e+00> : vector<32x32xf32>
    %2 = tpu.matmul %0, %1, %cst {dimension_numbers = #tpu.dot_dimension_numbers<[1], [0], [0], [1], [0, 0, 1, 1], [], []>} : vector<32x147xf32>, vector<147x32xf32>, vector<32x32xf32> -> vector<32x32xf32>
    %c0_3 = arith.constant 0 : index
    %c0_4 = arith.constant 0 : index
    %3 = vector.load %arg4[%c0_3, %c0_4] : memref<1x32xf32, #tpu.memory_space<vmem>>, vector<1x32xf32>
    %4 = vector.broadcast %3 : vector<1x32xf32> to vector<32x32xf32>
    %5 = arith.addf %2, %4 : vector<32x32xf32>
    %c0_5 = arith.constant 0 : index
    %c0_6 = arith.constant 0 : index
    %6 = vector.load %arg5[%c0_5, %c0_6] : memref<32x32xf32, #tpu.memory_space<vmem>>, vector<32x32xf32>
    tpu.vector_store %arg5[%c0_5, %c0_6], %5 {strides = array<i32>} : memref<32x32xf32, #tpu.memory_space<vmem>>, vector<32x32xf32>,
    return
  }
  func.func @transform_0(%arg0: i32, %arg1: i32) -> (i32, i32) {
    %c0_i32 = arith.constant 0 : i32
    %c0_i32_0 = arith.constant 0 : i32
    return %arg0, %c0_i32 : i32, i32
  }
  func.func @transform_1(%arg0: i32, %arg1: i32) -> (i32, i32) {
    %c0_i32 = arith.constant 0 : i32
    %c0_i32_0 = arith.constant 0 : i32
    return %c0_i32, %arg1 : i32, i32
  }
  func.func @transform_2(%arg0: i32, %arg1: i32) -> (i32, i32) {
    %c0_i32 = arith.constant 0 : i32
    %c0_i32_0 = arith.constant 0 : i32
    return %c0_i32, %arg1 : i32, i32
  }
  func.func @transform_3(%arg0: i32, %arg1: i32) -> (i32, i32) {
    %c0_i32 = arith.constant 0 : i32
    return %arg0, %arg1 : i32, i32
  }
}

</mosaic_0001>

<llo_original>
// kernel: tpu_custom_call.1
$region0: #{tpu_custom_call.1}
  #allocation0 [shape = 'u32[]', space=smem, size = 0x4, offset = 0x4, fixed_abs, tag = 'smem constant byte address 0x4 - core index']
  #allocation1 [shape = 'u32[144,128]{1,0:T(1,128)}', space=vmem, size = 0x12000, scoped, tag = 'internal scratch']
  %s0 = inlined_call_operand.vmem [shape: f32[32,147], index: 0, kind: input, shape index: {}]
  %s1 = inlined_call_operand.vmem [shape: f32[147,32], index: 1, kind: input, shape index: {}]
  %s2 = inlined_call_operand.vmem [shape: f32[1,32], index: 2, kind: input, shape index: {}]
  %s3 = inlined_call_operand.hbm [shape: f32[32,32], index: 3, kind: output, shape index: {}]
  %s4 = sld [smem:[#allocation0]]
  $region22: #{tpu_custom_call.1} parent=0
    _
  %s6 = ssub.s32 1, %s4
  %s7 = scalar_select 0, %s6, %s4
  $region1: #{tpu_custom_call.1} parent=0
    #allocation2 [shape = 'u8[16384]{0}', space=vmem, size = 0x4000, scoped, tag = 'output window, operand 0, single buffered']
    #allocation3 [shape = 's32[1]{0}', space=sflag, size = 0x4, scoped, tag = 'scoped memory for tpu_custom_call.1']
    %8 = vsyncpa [#allocation3], 0
    // Predicated region
    $region2: #{tpu_custom_call.1} parent=1 // pred_check
      _
    $region3: #{tpu_custom_call.1} parent=1 // pred_check_branch
      %10 = sbr.rel (0) target = $region5
    $region4: #{tpu_custom_call.1} parent=1 // pred_region
      _
    $region5: #{tpu_custom_call.1} parent=1 // pred_fallthru
      _
    // Predicated region
    $region6: #{tpu_custom_call.1} parent=1 // pred_check
      _
    $region7: #{tpu_custom_call.1} parent=1 // pred_check_branch
      %12 = sbr.rel (0) target = $region9
    $region8: #{tpu_custom_call.1} parent=1 // pred_region
      _
    $region9: #{tpu_custom_call.1} parent=1 // pred_fallthru
      _
    // Predicated region
    $region10: #{tpu_custom_call.1} parent=1 // pred_check
      _
    $region11: #{tpu_custom_call.1} parent=1 // pred_check_branch
      %14 = sbr.rel (0) target = $region13
    $region12: #{tpu_custom_call.1} parent=1 // pred_region
      _
    $region13: #{tpu_custom_call.1} parent=1 // pred_fallthru
      _
    %v15 = vld [vmem:[%s0] sm:$0xff]
    %v16 = vld [vmem:[%s0 + $0x8] sm:$0xff]
    %v17 = vld [vmem:[%s0 + $0x10] sm:$0xff]
    %v18 = vld [vmem:[%s0 + $0x18] sm:$0xff]
    %v19 = vld [vmem:[%s0 + $0x20] sm:$0xff]
    %v20 = vld [vmem:[%s0 + $0x28] sm:$0xff]
    %v21 = vld [vmem:[%s0 + $0x30] sm:$0xff]
    %v22 = vld [vmem:[%s0 + $0x38] sm:$0xff]
    %v23 = vld [vmem:[%s1] sm:$0xff]
    %v24 = vld [vmem:[%s1 + $0x8] sm:$0xff]
    %v25 = vld [vmem:[%s1 + $0x10] sm:$0xff]
    %v26 = vld [vmem:[%s1 + $0x18] sm:$0xff]
    %v27 = vld [vmem:[%s1 + $0x20] sm:$0xff]
    %v28 = vld [vmem:[%s1 + $0x28] sm:$0xff]
    %v29 = vld [vmem:[%s1 + $0x30] sm:$0xff]
    %v30 = vld [vmem:[%s1 + $0x38] sm:$0xff]
    %v31 = vld [vmem:[%s1 + $0x40] sm:$0xff]
    %v32 = vld [vmem:[%s1 + $0x48] sm:$0xff]
    %v33 = vld [vmem:[%s1 + $0x50] sm:$0xff]
    %v34 = vld [vmem:[%s1 + $0x58] sm:$0xff]
    %v35 = vld [vmem:[%s1 + $0x60] sm:$0xff]
    %v36 = vld [vmem:[%s1 + $0x68] sm:$0xff]
    %v37 = vld [vmem:[%s1 + $0x70] sm:$0xff]
    %v38 = vld [vmem:[%s1 + $0x78] sm:$0xff]
    %v39 = vld [vmem:[%s1 + $0x80] sm:$0xff]
    %v40 = vld [vmem:[%s1 + $0x88] sm:$0xff]
    %v41 = vld [vmem:[%s1 + $0x90] sm:$0x7]
    %v42 = vld [vmem:[%s2] sm:$0x1]
    %v44 = vlaneseq
    %v45 = vshrl.u32 %v44, 7
    %v46 = vsub.s32 0, %v45
    %v47 = vrot.slane %v42, %v46
    %vm49 = vcmask 154624
    %v51 = vsel %vm49, %v16, 0
    %v54 = vsel %vm49, %v18, 0
    %v57 = vsel %vm49, %v20, 0
    %v60 = vsel %vm49, %v22, 0
    %vm62 = vcmask 1042432
    %v64 = vsel %vm62, %v41, 0
    %66 = vmatprep.subr.mxu0 0.0
    %67 = vmatpush1.msra.mxu0 %v23
    %68 = vmatprep.subr.mxu0 0.0
    %69 = vmatpush1.msra.mxu0 %v24
    %70 = vmatprep.subr.mxu0 0.0
    %71 = vmatpush1.msra.mxu0 %v25
    %72 = vmatprep.subr.mxu0 0.0
    %73 = vmatpush1.msra.mxu0 %v26
    %74 = vmatprep.subr.mxu0 0.0
    %75 = vmatpush1.msra.mxu0 %v27
    %76 = vmatprep.subr.mxu0 0.0
    %77 = vmatpush1.msra.mxu0 %v28
    %78 = vmatprep.subr.mxu0 0.0
    %79 = vmatpush1.msra.mxu0 %v29
    %80 = vmatprep.subr.mxu0 0.0
    %81 = vmatpush1.msra.mxu0 %v30
    %82 = vmatprep.subr.mxu0 0.0
    %83 = vmatpush1.msra.mxu0 %v31
    %84 = vmatprep.subr.mxu0 0.0
    %85 = vmatpush1.msra.mxu0 %v32
    %86 = vmatprep.subr.mxu0 0.0
    %87 = vmatpush1.msra.mxu0 %v33
    %88 = vmatprep.subr.mxu0 0.0
    %89 = vmatpush1.msra.mxu0 %v34
    %90 = vmatprep.subr.mxu0 0.0
    %91 = vmatpush1.msra.mxu0 %v35
    %92 = vmatprep.subr.mxu0 0.0
    %93 = vmatpush1.msra.mxu0 %v36
    %94 = vmatprep.subr.mxu0 0.0
    %95 = vmatpush1.msra.mxu0 %v37
    %96 = vmatprep.subr.mxu0 0.0
    %97 = vmatpush1.msra.mxu0 %v38
    %98 = vmatprep.subr.mxu0 0.0
    %99 = vmatpush1.msra.mxu0 %v39
    %100 = vmatprep.subr.mxu0 0.0
    %101 = vmatpush1.msra.mxu0 %v40
    %102 = vmatprep.subr.mxu0 0.0
    %103 = vmatpush1.msra.mxu0 %v64
    %104 = vmatprep.subr.mxu0 0.0
    %105 = vmatpush1.msra.mxu0 0.0
    %106 = vmatprep.subr.mxu0 0.0
    %107 = vmatpush1.msra.mxu0 0.0
    %108 = vmatprep.subr.mxu0 0.0
    %109 = vmatpush1.msra.mxu0 0.0
    %110 = vmatprep.subr.mxu0 0.0
    %111 = vmatpush1.msra.mxu0 0.0
    %112 = vmatprep.subr.mxu0 0.0
    %113 = vmatpush1.msra.mxu0 0.0
    %114 = vmatprep.subr.mxu0 0.0
    %115 = vmatpush1.msra.mxu0 0.0
    %116 = vmatprep.subr.mxu0 0.0
    %117 = vmatpush1.msra.mxu0 0.0
    %118 = vmatprep.subr.mxu0 0.0
    %119 = vmatpush1.msra.mxu0 0.0
    %120 = vmatprep.subr.mxu0 0.0
    %121 = vmatpush1.msra.mxu0 0.0
    %122 = vmatprep.subr.mxu0 0.0
    %123 = vmatpush1.msra.mxu0 0.0
    %124 = vmatprep.subr.mxu0 0.0
    %125 = vmatpush1.msra.mxu0 0.0
    %126 = vmatprep.subr.mxu0 0.0
    %127 = vmatpush1.msra.mxu0 0.0
    %128 = vmatprep.subr.mxu0 0.0
    %129 = vmatpush1.msra.mxu0 0.0
    %130 = vmatprep.mubr.f32.mxu0 %v51
    %131 = vmatmul.mubr.f32.gmra.mrb[0].mxu0 %v15
    %v132 = vpop.f32.mrb[0].mxu0
    %v133 = vadd.f32 %v47, %v132
    %v134 = vpop.f32.mrb[0].mxu0
    %135 = vmatprep.mubr.f32.mxu0 %v54
    %136 = vmatmul.mubr.f32.gmra.mrb[0].mxu0 %v17
    %v137 = vpop.f32.mrb[0].mxu0
    %v138 = vadd.f32 %v47, %v137
    %v139 = vpop.f32.mrb[0].mxu0
    %140 = vmatprep.mubr.f32.mxu0 %v57
    %141 = vmatmul.mubr.f32.gmra.mrb[0].mxu0 %v19
    %v142 = vpop.f32.mrb[0].mxu0
    %v143 = vadd.f32 %v47, %v142
    %v144 = vpop.f32.mrb[0].mxu0
    %145 = vmatprep.mubr.f32.mxu0 %v60
    %146 = vmatmul.mubr.f32.gmra.mrb[0].mxu0 %v21
    %v147 = vpop.f32.mrb[0].mxu0
    %v148 = vadd.f32 %v47, %v147
    %v149 = vpop.f32.mrb[0].mxu0
    %150 = vdwg.mxu0
    %vm151 = vcmask 261120
    %152 = vst.msk [vmem:[#allocation2] sm:$0xff] %vm151, %v133
    %153 = vst.msk [vmem:[#allocation2 + $0x8] sm:$0xff] %vm151, %v138
    %154 = vst.msk [vmem:[#allocation2 + $0x10] sm:$0xff] %vm151, %v143
    %155 = vst.msk [vmem:[#allocation2 + $0x18] sm:$0xff] %vm151, %v148
    // Predicated region
    $region14: #{tpu_custom_call.1} parent=1 // pred_check
      _
    $region15: #{tpu_custom_call.1} parent=1 // pred_check_branch
      %157 = sbr.rel (0) target = $region17
    $region16: #{tpu_custom_call.1} parent=1 // pred_region
      %s159 = ssub.s32 512, 512
      %160 = vsyncadd [#allocation3], %s159
      %s161 = sshll.u32 [#allocation2], 4
      %s162 = int_to_ptr.vmem [resolvable:$true] %s161
      %167 = dma.vmem_to_hbm [thread:$0]  %s162, 512, %s3, [#allocation3], 128, 128, 8
    $region17: #{tpu_custom_call.1} parent=1 // pred_fallthru
      _
    // Predicated region
    $region18: #{tpu_custom_call.1} parent=1 // pred_check
      _
    $region19: #{tpu_custom_call.1} parent=1 // pred_check_branch
      %169 = sbr.rel (0) target = $region21
    $region20: #{tpu_custom_call.1} parent=1 // pred_region
      %170 = dma.done [#allocation3], 512
    $region21: #{tpu_custom_call.1} parent=1 // pred_fallthru
      _
    %171 = vsyncpa [#allocation3], 1

</llo_original>
